<compile_context>
chip_gen: v7x
topology: tpu7x:2x2x1
jax: 0.10.0
libtpu: 0.0.40
codegen_flags: <defaults>
</compile_context>

<pallas_src>
import jax
import jax.numpy as jnp
import numpy as np
from jax.experimental import pallas as pl
from jax.experimental.pallas import tpu as pltpu


def _make_causal_conv1d_kernel(cin, cout, ksize, tile_l, use_vpu):
    pad = ksize - 1

    def kernel(x_ref, w2_ref, b_ref, o_ref, carry_ref):
        # x_ref    : (1, Cin, tL)          current input tile (NCL layout)
        # w2_ref   : (Cout, K*Cin)         weight, column index = k*Cin + c
        # b_ref    : (Cout, 1)             bias
        # o_ref    : (1, Cout, tL)         output tile
        # carry_ref: (Cin, max(K-1, 1))    last K-1 input cols of previous tile
        t = pl.program_id(1)

        x = x_ref[0]                                          # (Cin, tL)

        if pad > 0:
            # First L-tile of each batch element: causal history is zeros.
            @pl.when(t == 0)
            def _():
                carry_ref[...] = jnp.zeros_like(carry_ref)

            # Sliding window: [previous K-1 columns | current tile]
            xw = jnp.concatenate([carry_ref[...], x], axis=-1)  # (Cin, tL+pad)
            # Save the last K-1 history columns for the next L-tile.
            carry_ref[...] = xw[:, tile_l:]
        else:
            xw = x

        if use_vpu:
            # Tiny-channel path: K*Cin shifted vector FMAs on the VPU with L on
            # lanes; skips the badly-padded MXU.  Bias folded into the init.
            acc = jnp.broadcast_to(b_ref[...].astype(jnp.float32),
                                   (cout, tile_l))
            for k in range(ksize):
                for c in range(cin):
                    j = k * cin + c
                    w_col = w2_ref[:, j:j + 1].astype(jnp.float32)         # (Cout, 1)
                    x_row = xw[c:c + 1, k:k + tile_l].astype(jnp.float32)  # (1, tL)
                    acc = acc + w_col * x_row
        else:
            # Wide-channel path: fold all K taps into one MXU matmul (im2col).
            x2 = jnp.concatenate([xw[:, k:k + tile_l] for k in range(ksize)],
                                 axis=0)                       # (K*Cin, tL)
            acc = jnp.dot(w2_ref[...], x2,
                          preferred_element_type=jnp.float32)  # (Cout, tL)
            acc = acc + b_ref[...].astype(jnp.float32)

        o_ref[0] = acc.astype(o_ref.dtype)

    return kernel


def _choose_tile_l(length, cin, cout, ksize, itemsize):
    """Full L when short; else a lane-dense multiple of 128 sized so the
    double-buffered blocks stay well inside the scoped VMEM budget
    (safe for v5e/v6e 128 MiB and v7x 64 MiB)."""
    if length <= 1024:
        return length
    budget = 8 * 1024 * 1024   # per-step working-set target
    per_col = itemsize * (2 * cin + 2 * cout + (ksize + 1) * cin) + 4 * cout
    for cand in (1024, 512, 256, 128):
        if cand * per_col <= budget:
            return cand
    return 128


def causal_conv1d(x, weight, bias, *, tile_l=None):
    """Causal 1D convolution matching PyTorch CausalConv1d.forward.

    x:      (N, Cin, L)   (PyTorch NCL layout, consumed directly)
    weight: (Cout, Cin, K)
    bias:   (Cout,)
    returns (N, Cout, L)
    """
    n, cin, length = x.shape
    cout, cin_w, ksize = weight.shape
    assert cin_w == cin, (cin_w, cin)
    pad = ksize - 1

    # Only tiny parameter reshapes on the wrapper side (no activation traffic):
    # w2[o, k*Cin + c] = weight[o, c, k]
    w2 = jnp.transpose(weight, (0, 2, 1)).reshape(cout, ksize * cin)
    b2 = bias.reshape(cout, 1)

    if tile_l is None:
        tile_l = _choose_tile_l(length, cin, cout, ksize, x.dtype.itemsize)
    num_l_tiles = pl.cdiv(length, tile_l)

    use_vpu = (cin * ksize) <= 64   # tiny channels -> VPU shifted-MAC path

    kernel = _make_causal_conv1d_kernel(cin, cout, ksize, tile_l, use_vpu)

    return pl.pallas_call(
        kernel,
        out_shape=jax.ShapeDtypeStruct((n, cout, length), x.dtype),
        grid=(n, num_l_tiles),
        in_specs=[
            pl.BlockSpec((1, cin, tile_l), lambda b, t: (b, 0, t)),
            # Constant index_map -> weights/bias are DMA'd once and kept
            # resident across the grid (their second pipeline buffer is tiny;
            # pl.Buffered(1) could reclaim it for extra v7x headroom).
            pl.BlockSpec((cout, ksize * cin), lambda b, t: (0, 0)),
            pl.BlockSpec((cout, 1), lambda b, t: (0, 0)),
        ],
        out_specs=pl.BlockSpec((1, cout, tile_l), lambda b, t: (b, 0, t)),
        scratch_shapes=[pltpu.VMEM((cin, max(pad, 1)), x.dtype)],
        compiler_params=pltpu.CompilerParams(
            # Batch axis is parallel; the L-tile axis carries the causal
            # history in scratch, so it must stay sequential ("arbitrary").
            dimension_semantics=("parallel", "arbitrary"),
            vmem_limit_bytes=32 * 1024 * 1024,
        ),
    )(x, w2, b2)


def _reference_causal_conv1d(x, weight, bias):
    """Pure-jnp reference (mirrors the PyTorch module semantics)."""
    n, cin, length = x.shape
    cout, _, ksize = weight.shape
    pad = ksize - 1
    xp = jnp.pad(x, ((0, 0), (0, 0), (pad, 0)))               # (N, Cin, L+pad)
    out = jnp.zeros((n, cout, length), jnp.float32)
    for k in range(ksize):
        out = out + jnp.einsum('oc,ncl->nol', weight[:, :, k],
                               xp[:, :, k:k + length])
    return out + bias[None, :, None]


if __name__ == "__main__":
    # Shapes consistent with the module's forward:
    # batch=2, in_channels=4, out_channels=8, seq_len=16, kernel_size=3.
    N, Cin, Cout, L, K = 2, 4, 8, 16, 3

    key = jax.random.PRNGKey(0)
    kx, kw, kb = jax.random.split(key, 3)

    x = jax.random.normal(kx, (N, Cin, L), dtype=jnp.float32)

    # Deterministic parameter init (same fan-in scale as nn.Conv1d default).
    bound = 1.0 / np.sqrt(Cin * K)
    weight = jax.random.uniform(kw, (Cout, Cin, K),
                                minval=-bound, maxval=bound,
                                dtype=jnp.float32)
    bias = jax.random.uniform(kb, (Cout,), minval=-bound, maxval=bound,
                              dtype=jnp.float32)

    out = jax.jit(causal_conv1d)(x, weight, bias)
    out = jax.block_until_ready(out)

    ref = _reference_causal_conv1d(x, weight, bias)
    np.testing.assert_allclose(np.asarray(out), np.asarray(ref),
                               rtol=1e-5, atol=1e-5)

    print("KERNEL_OK")
</pallas_src>

<mosaic_0001>
module attributes {stable_mosaic.version = 11 : i64} {
  func.func @kernel(%arg0: i32, %arg1: i32, %arg2: memref<1x4x16xf32, #tpu.memory_space<vmem>>, %arg3: memref<8x12xf32, #tpu.memory_space<vmem>>, %arg4: memref<8x1xf32, #tpu.memory_space<vmem>>, %arg5: memref<1x8x16xf32, #tpu.memory_space<vmem>>, %arg6: memref<4x2xf32, #tpu.memory_space<vmem>>) attributes {dimension_semantics = [#tpu.dimension_semantics<parallel>, #tpu.dimension_semantics<arbitrary>], iteration_bounds = array<i64: 2, 1>, scalar_prefetch = 0 : i64, scratch_operands = 1 : i64, tpu.core_type = #tpu.core_type<tc>, window_params = [{transform_indices = @transform_0, window_bounds = array<i64: 1, 4, 16>}, {pipeline_mode = #tpu.pipeline_mode<synchronous>, transform_indices = @transform_1, window_bounds = array<i64: 8, 12>}, {pipeline_mode = #tpu.pipeline_mode<synchronous>, transform_indices = @transform_2, window_bounds = array<i64: 8, 1>}, {transform_indices = @transform_3, window_bounds = array<i64: 1, 8, 16>}]} {
    %c0 = arith.constant 0 : index
    %c0_0 = arith.constant 0 : index
    %c0_1 = arith.constant 0 : index
    %0 = vector.load %arg2[%c0, %c0_0, %c0_1] : memref<1x4x16xf32, #tpu.memory_space<vmem>>, vector<1x4x16xf32>
    %1 = vector.shape_cast %0 : vector<1x4x16xf32> to vector<4x16xf32>
    %c0_i32 = arith.constant 0 : i32
    %2 = arith.cmpi eq, %arg1, %c0_i32 : i32
    %3 = arith.extui %2 : i1 to i32
    %c0_i32_2 = arith.constant 0 : i32
    %4 = arith.cmpi ne, %3, %c0_i32_2 : i32
    scf.if %4 {
      %cst = arith.constant 0.000000e+00 : f32
      %87 = vector.broadcast %cst : f32 to vector<4x2xf32>
      %c0_25 = arith.constant 0 : index
      %c0_26 = arith.constant 0 : index
      %88 = vector.load %arg6[%c0_25, %c0_26] : memref<4x2xf32, #tpu.memory_space<vmem>>, vector<4x2xf32>
      tpu.vector_store %arg6[%c0_25, %c0_26], %87 {strides = array<i32>} : memref<4x2xf32, #tpu.memory_space<vmem>>, vector<4x2xf32>,
    } else {
    }
    %c0_3 = arith.constant 0 : index
    %c0_4 = arith.constant 0 : index
    %5 = vector.load %arg6[%c0_3, %c0_4] : memref<4x2xf32, #tpu.memory_space<vmem>>, vector<4x2xf32>
    %6 = tpu.concatenate %5, %1 in 1 : vector<4x2xf32>, vector<4x16xf32> -> vector<4x18xf32>
    %7 = vector.extract_strided_slice %6 {offsets = [0, 16], sizes = [4, 2], strides = [1, 1]} : vector<4x18xf32> to vector<4x2xf32>
    %c0_5 = arith.constant 0 : index
    %c0_6 = arith.constant 0 : index
    %8 = vector.load %arg6[%c0_5, %c0_6] : memref<4x2xf32, #tpu.memory_space<vmem>>, vector<4x2xf32>
    tpu.vector_store %arg6[%c0_5, %c0_6], %7 {strides = array<i32>} : memref<4x2xf32, #tpu.memory_space<vmem>>, vector<4x2xf32>,
    %c0_7 = arith.constant 0 : index
    %c0_8 = arith.constant 0 : index
    %9 = vector.load %arg4[%c0_7, %c0_8] : memref<8x1xf32, #tpu.memory_space<vmem>>, vector<8x1xf32>
    %10 = vector.shape_cast %9 : vector<8x1xf32> to vector<8x1xf32>
    %11 = vector.broadcast %10 : vector<8x1xf32> to vector<8x16xf32>
    %c0_9 = arith.constant 0 : index
    %c0_10 = arith.constant 0 : index
    %12 = vector.load %arg3[%c0_9, %c0_10] : memref<8x12xf32, #tpu.memory_space<vmem>>, vector<8x1xf32>
    %13 = vector.extract_strided_slice %6 {offsets = [0, 0], sizes = [1, 16], strides = [1, 1]} : vector<4x18xf32> to vector<1x16xf32>
    %14 = vector.broadcast %12 : vector<8x1xf32> to vector<8x16xf32>
    %15 = vector.broadcast %13 : vector<1x16xf32> to vector<8x16xf32>
    %16 = arith.mulf %14, %15 : vector<8x16xf32>
    %17 = arith.addf %11, %16 : vector<8x16xf32>
    %c0_11 = arith.constant 0 : index
    %c1 = arith.constant 1 : index
    %18 = vector.load %arg3[%c0_11, %c1] : memref<8x12xf32, #tpu.memory_space<vmem>>, vector<8x1xf32>
    %19 = vector.extract_strided_slice %6 {offsets = [1, 0], sizes = [1, 16], strides = [1, 1]} : vector<4x18xf32> to vector<1x16xf32>
    %20 = vector.broadcast %18 : vector<8x1xf32> to vector<8x16xf32>
    %21 = vector.broadcast %19 : vector<1x16xf32> to vector<8x16xf32>
    %22 = arith.mulf %20, %21 : vector<8x16xf32>
    %23 = arith.addf %17, %22 : vector<8x16xf32>
    %c0_12 = arith.constant 0 : index
    %c2 = arith.constant 2 : index
    %24 = vector.load %arg3[%c0_12, %c2] : memref<8x12xf32, #tpu.memory_space<vmem>>, vector<8x1xf32>
    %25 = vector.extract_strided_slice %6 {offsets = [2, 0], sizes = [1, 16], strides = [1, 1]} : vector<4x18xf32> to vector<1x16xf32>
    %26 = vector.broadcast %24 : vector<8x1xf32> to vector<8x16xf32>
    %27 = vector.broadcast %25 : vector<1x16xf32> to vector<8x16xf32>
    %28 = arith.mulf %26, %27 : vector<8x16xf32>
    %29 = arith.addf %23, %28 : vector<8x16xf32>
    %c0_13 = arith.constant 0 : index
    %c3 = arith.constant 3 : index
    %30 = vector.load %arg3[%c0_13, %c3] : memref<8x12xf32, #tpu.memory_space<vmem>>, vector<8x1xf32>
    %31 = vector.extract_strided_slice %6 {offsets = [3, 0], sizes = [1, 16], strides = [1, 1]} : vector<4x18xf32> to vector<1x16xf32>
    %32 = vector.broadcast %30 : vector<8x1xf32> to vector<8x16xf32>
    %33 = vector.broadcast %31 : vector<1x16xf32> to vector<8x16xf32>
    %34 = arith.mulf %32, %33 : vector<8x16xf32>
    %35 = arith.addf %29, %34 : vector<8x16xf32>
    %c0_14 = arith.constant 0 : index
    %c4 = arith.constant 4 : index
    %36 = vector.load %arg3[%c0_14, %c4] : memref<8x12xf32, #tpu.memory_space<vmem>>, vector<8x1xf32>
    %37 = vector.extract_strided_slice %6 {offsets = [0, 1], sizes = [1, 16], strides = [1, 1]} : vector<4x18xf32> to vector<1x16xf32>
    %38 = vector.broadcast %36 : vector<8x1xf32> to vector<8x16xf32>
    %39 = vector.broadcast %37 : vector<1x16xf32> to vector<8x16xf32>
    %40 = arith.mulf %38, %39 : vector<8x16xf32>
    %41 = arith.addf %35, %40 : vector<8x16xf32>
    %c0_15 = arith.constant 0 : index
    %c5 = arith.constant 5 : index
    %42 = vector.load %arg3[%c0_15, %c5] : memref<8x12xf32, #tpu.memory_space<vmem>>, vector<8x1xf32>
    %43 = vector.extract_strided_slice %6 {offsets = [1, 1], sizes = [1, 16], strides = [1, 1]} : vector<4x18xf32> to vector<1x16xf32>
    %44 = vector.broadcast %42 : vector<8x1xf32> to vector<8x16xf32>
    %45 = vector.broadcast %43 : vector<1x16xf32> to vector<8x16xf32>
    %46 = arith.mulf %44, %45 : vector<8x16xf32>
    %47 = arith.addf %41, %46 : vector<8x16xf32>
    %c0_16 = arith.constant 0 : index
    %c6 = arith.constant 6 : index
    %48 = vector.load %arg3[%c0_16, %c6] : memref<8x12xf32, #tpu.memory_space<vmem>>, vector<8x1xf32>
    %49 = vector.extract_strided_slice %6 {offsets = [2, 1], sizes = [1, 16], strides = [1, 1]} : vector<4x18xf32> to vector<1x16xf32>
    %50 = vector.broadcast %48 : vector<8x1xf32> to vector<8x16xf32>
    %51 = vector.broadcast %49 : vector<1x16xf32> to vector<8x16xf32>
    %52 = arith.mulf %50, %51 : vector<8x16xf32>
    %53 = arith.addf %47, %52 : vector<8x16xf32>
    %c0_17 = arith.constant 0 : index
    %c7 = arith.constant 7 : index
    %54 = vector.load %arg3[%c0_17, %c7] : memref<8x12xf32, #tpu.memory_space<vmem>>, vector<8x1xf32>
    %55 = vector.extract_strided_slice %6 {offsets = [3, 1], sizes = [1, 16], strides = [1, 1]} : vector<4x18xf32> to vector<1x16xf32>
    %56 = vector.broadcast %54 : vector<8x1xf32> to vector<8x16xf32>
    %57 = vector.broadcast %55 : vector<1x16xf32> to vector<8x16xf32>
    %58 = arith.mulf %56, %57 : vector<8x16xf32>
    %59 = arith.addf %53, %58 : vector<8x16xf32>
    %c0_18 = arith.constant 0 : index
    %c8 = arith.constant 8 : index
    %60 = vector.load %arg3[%c0_18, %c8] : memref<8x12xf32, #tpu.memory_space<vmem>>, vector<8x1xf32>
    %61 = vector.extract_strided_slice %6 {offsets = [0, 2], sizes = [1, 16], strides = [1, 1]} : vector<4x18xf32> to vector<1x16xf32>
    %62 = vector.broadcast %60 : vector<8x1xf32> to vector<8x16xf32>
    %63 = vector.broadcast %61 : vector<1x16xf32> to vector<8x16xf32>
    %64 = arith.mulf %62, %63 : vector<8x16xf32>
    %65 = arith.addf %59, %64 : vector<8x16xf32>
    %c0_19 = arith.constant 0 : index
    %c9 = arith.constant 9 : index
    %66 = vector.load %arg3[%c0_19, %c9] : memref<8x12xf32, #tpu.memory_space<vmem>>, vector<8x1xf32>
    %67 = vector.extract_strided_slice %6 {offsets = [1, 2], sizes = [1, 16], strides = [1, 1]} : vector<4x18xf32> to vector<1x16xf32>
    %68 = vector.broadcast %66 : vector<8x1xf32> to vector<8x16xf32>
    %69 = vector.broadcast %67 : vector<1x16xf32> to vector<8x16xf32>
    %70 = arith.mulf %68, %69 : vector<8x16xf32>
    %71 = arith.addf %65, %70 : vector<8x16xf32>
    %c0_20 = arith.constant 0 : index
    %c10 = arith.constant 10 : index
    %72 = vector.load %arg3[%c0_20, %c10] : memref<8x12xf32, #tpu.memory_space<vmem>>, vector<8x1xf32>
    %73 = vector.extract_strided_slice %6 {offsets = [2, 2], sizes = [1, 16], strides = [1, 1]} : vector<4x18xf32> to vector<1x16xf32>
    %74 = vector.broadcast %72 : vector<8x1xf32> to vector<8x16xf32>
    %75 = vector.broadcast %73 : vector<1x16xf32> to vector<8x16xf32>
    %76 = arith.mulf %74, %75 : vector<8x16xf32>
    %77 = arith.addf %71, %76 : vector<8x16xf32>
    %c0_21 = arith.constant 0 : index
    %c11 = arith.constant 11 : index
    %78 = vector.load %arg3[%c0_21, %c11] : memref<8x12xf32, #tpu.memory_space<vmem>>, vector<8x1xf32>
    %79 = vector.extract_strided_slice %6 {offsets = [3, 2], sizes = [1, 16], strides = [1, 1]} : vector<4x18xf32> to vector<1x16xf32>
    %80 = vector.broadcast %78 : vector<8x1xf32> to vector<8x16xf32>
    %81 = vector.broadcast %79 : vector<1x16xf32> to vector<8x16xf32>
    %82 = arith.mulf %80, %81 : vector<8x16xf32>
    %83 = arith.addf %77, %82 : vector<8x16xf32>
    %c0_22 = arith.constant 0 : index
    %c0_23 = arith.constant 0 : index
    %c0_24 = arith.constant 0 : index
    %84 = vector.load %arg5[%c0_22, %c0_23, %c0_24] : memref<1x8x16xf32, #tpu.memory_space<vmem>>, vector<1x8x16xf32>
    %85 = vector.shape_cast %84 : vector<1x8x16xf32> to vector<8x16xf32>
    %86 = vector.shape_cast %83 : vector<8x16xf32> to vector<1x8x16xf32>
    tpu.vector_store %arg5[%c0_22, %c0_23, %c0_24], %86 {strides = array<i32>} : memref<1x8x16xf32, #tpu.memory_space<vmem>>, vector<1x8x16xf32>,
    return
  }
  func.func @transform_0(%arg0: i32, %arg1: i32) -> (i32, i32, i32) {
    %c0_i32 = arith.constant 0 : i32
    %c0_i32_0 = arith.constant 0 : i32
    return %arg0, %c0_i32, %arg1 : i32, i32, i32
  }
  func.func @transform_1(%arg0: i32, %arg1: i32) -> (i32, i32) {
    %c0_i32 = arith.constant 0 : i32
    %c0_i32_0 = arith.constant 0 : i32
    %c0_i32_1 = arith.constant 0 : i32
    return %c0_i32, %c0_i32_0 : i32, i32
  }
  func.func @transform_2(%arg0: i32, %arg1: i32) -> (i32, i32) {
    %c0_i32 = arith.constant 0 : i32
    %c0_i32_0 = arith.constant 0 : i32
    %c0_i32_1 = arith.constant 0 : i32
    return %c0_i32, %c0_i32_0 : i32, i32
  }
  func.func @transform_3(%arg0: i32, %arg1: i32) -> (i32, i32, i32) {
    %c0_i32 = arith.constant 0 : i32
    %c0_i32_0 = arith.constant 0 : i32
    return %arg0, %c0_i32, %arg1 : i32, i32, i32
  }
}

</mosaic_0001>

<llo_original>
// kernel: causal_conv1d.1
$region0: #{causal_conv1d.1}
  #allocation0 [shape = 'u32[]', space=smem, size = 0x4, offset = 0x4, fixed_abs, tag = 'smem constant byte address 0x4 - core index']
  #allocation1 [shape = 'u32[144,128]{1,0:T(1,128)}', space=vmem, size = 0x12000, scoped, tag = 'internal scratch']
  #allocation2 [shape = 'f32[4,2]{1,0:T(4,128)}', space=vmem, size = 0x800, scoped, tag = 'scratch operand']
  %s0 = inlined_call_operand.vmem [shape: f32[2,4,16], index: 0, kind: input, shape index: {}]
  %s1 = inlined_call_operand.vmem [shape: f32[8,12], index: 1, kind: input, shape index: {}]
  %s2 = inlined_call_operand.vmem [shape: f32[8,1], index: 2, kind: input, shape index: {}]
  %s3 = inlined_call_operand.hbm [shape: f32[2,8,16], index: 3, kind: output, shape index: {}]
  %s4 = sld [smem:[#allocation0]]
  $region49: #{causal_conv1d.1} parent=0
    _
  %s6 = ssub.s32 1, %s4
  %s7 = scalar_select 0, %s6, %s4
  $region1: #{causal_conv1d.1} parent=0
    #allocation3 [shape = 'u8[8192]{0}', space=vmem, size = 0x2000, scoped, tag = 'output window, operand 0']
    #allocation4 [shape = 's32[2]{0}', space=sflag, size = 0x8, scoped, tag = 'scoped memory for causal_conv1d.1']
    %8 = vsyncpa [#allocation4], 0
    %s9 = scalar_lea.sflag [#allocation4], 1
    %10 = vsyncpa %s9, 0
    loop: start=0, step=1, limit=4
    $region2: #{causal_conv1d.1} parent=1 // loop_pre_header
      _
    $region3: #{causal_conv1d.1} parent=1 // loop_header
      %s12 = sphi 0, %s16
      %p13 = scmp.ge.s32.totalorder %s12, 4
      %s19 = sphi 0, %s31
      %s20 = sphi 0, %s27
      %s21 = sphi 0, %s19
      %s22 = sphi 0, %s20
      %s23 = sphi 0, %s21
      %s24 = sphi 0, %s22
      %s36 = sphi 0, %s38
      %s39 = sphi 0, %s36
      %s40 = sphi 0, %s39
      %s56 = sphi 0, %s40
      %s60 = sphi 0, %s60
      %s62 = sphi 0, %s60
      %s63 = sphi 0, %s62
      %s77 = sphi 0, %s63
      %s81 = sphi 0, %s81
      %s83 = sphi 0, %s81
      %s84 = sphi 0, %s83
      %s98 = sphi 0, %s84
      %s106 = sphi 0, %s108
      %s109 = sphi 0, %s106
      %s110 = sphi 0, %s109
      %s126 = sphi 0, %s110
    $region4: #{causal_conv1d.1} parent=1 // loop_header_branch
      %15 = sbr.rel (%p13) target = $region8
    $region5: #{causal_conv1d.1} parent=1 // loop_body
      %s17 = ssub.s32 %s12, 1
      %s18 = ssub.s32 %s12, 2
      %s25 = sadd.s32 1, %s20
      %p26 = scmp.ge.s32.totalorder %s25, 1
      %s27 = scalar_select %p26, 0, %s25
      %s28 = sadd.s32 1, %s19
      %s29 = scalar_select %p26, %s28, %s19
      %p30 = scmp.ge.s32.totalorder %s29, 2
      %s31 = scalar_select %p30, 0, %s29
      %s32 = ssub.s32 %s19, %s31
      %s33 = ssub.s32 %s20, %s27
      %s34 = sor.u32 %s32, %s33
      %p35 = scmp.eq.s32.totalorder %s34, 0
      %s37 = sadd.s32 %s36, 1
      %s38 = scalar_select %p35, %s36, %s37
      %p41 = pneg %p35
      %p42 = scmp.eq.s32.totalorder %s12, 1
      %p43 = por %p41, %p42
      %p44 = scmp.ne.s32.totalorder %s36, %s39
      %p45 = scmp.eq.s32.totalorder %s12, 0
      %p46 = por %p44, %p45
      %p47 = scmp.ne.s32.totalorder %s36, %s39
      %p48 = scmp.eq.s32.totalorder %s17, 1
      %p49 = por %p47, %p48
      %p50 = scmp.ne.s32.totalorder %s39, %s40
      %p51 = scmp.eq.s32.totalorder %s17, 0
      %p52 = por %p50, %p51
      %p53 = scmp.ne.s32.totalorder %s39, %s40
      %p54 = scmp.eq.s32.totalorder %s18, 1
      %p55 = por %p53, %p54
      %p57 = scmp.ne.s32.totalorder %s40, %s56
      %p58 = scmp.eq.s32.totalorder %s18, 0
      %p59 = por %p57, %p58
      %s61 = sadd.s32 %s60, 1
      %p64 = scmp.eq.s32.totalorder %s12, 1
      %p65 = scmp.ne.s32.totalorder %s60, %s62
      %p66 = scmp.eq.s32.totalorder %s12, 0
      %p67 = por %p65, %p66
      %p68 = scmp.ne.s32.totalorder %s60, %s62
      %p69 = scmp.eq.s32.totalorder %s17, 1
      %p70 = por %p68, %p69
      %p71 = scmp.ne.s32.totalorder %s62, %s63
      %p72 = scmp.eq.s32.totalorder %s17, 0
      %p73 = por %p71, %p72
      %p74 = scmp.ne.s32.totalorder %s62, %s63
      %p75 = scmp.eq.s32.totalorder %s18, 1
      %p76 = por %p74, %p75
      %p78 = scmp.ne.s32.totalorder %s63, %s77
      %p79 = scmp.eq.s32.totalorder %s18, 0
      %p80 = por %p78, %p79
      %s82 = sadd.s32 %s81, 1
      %p85 = scmp.eq.s32.totalorder %s12, 1
      %p86 = scmp.ne.s32.totalorder %s81, %s83
      %p87 = scmp.eq.s32.totalorder %s12, 0
      %p88 = por %p86, %p87
      %p89 = scmp.ne.s32.totalorder %s81, %s83
      %p90 = scmp.eq.s32.totalorder %s17, 1
      %p91 = por %p89, %p90
      %p92 = scmp.ne.s32.totalorder %s83, %s84
      %p93 = scmp.eq.s32.totalorder %s17, 0
      %p94 = por %p92, %p93
      %p95 = scmp.ne.s32.totalorder %s83, %s84
      %p96 = scmp.eq.s32.totalorder %s18, 1
      %p97 = por %p95, %p96
      %p99 = scmp.ne.s32.totalorder %s84, %s98
      %p100 = scmp.eq.s32.totalorder %s18, 0
      %p101 = por %p99, %p100
      %s102 = ssub.s32 %s19, %s31
      %s103 = ssub.s32 %s20, %s27
      %s104 = sor.u32 %s102, %s103
      %p105 = scmp.eq.s32.totalorder %s104, 0
      %s107 = sadd.s32 %s106, 1
      %s108 = scalar_select %p105, %s106, %s107
      %p111 = pneg %p105
      %p112 = scmp.eq.s32.totalorder %s12, 1
      %p113 = por %p111, %p112
      %p114 = scmp.ne.s32.totalorder %s106, %s109
      %p115 = scmp.eq.s32.totalorder %s12, 0
      %p116 = por %p114, %p115
      %p117 = scmp.ne.s32.totalorder %s106, %s109
      %p118 = scmp.eq.s32.totalorder %s17, 1
      %p119 = por %p117, %p118
      %p120 = scmp.ne.s32.totalorder %s109, %s110
      %p121 = scmp.eq.s32.totalorder %s17, 0
      %p122 = por %p120, %p121
      %p123 = scmp.ne.s32.totalorder %s109, %s110
      %p124 = scmp.eq.s32.totalorder %s18, 1
      %p125 = por %p123, %p124
      %p127 = scmp.ne.s32.totalorder %s110, %s126
      %p128 = scmp.eq.s32.totalorder %s18, 0
      %p129 = por %p127, %p128
      %p130 = scmp.le.s32.totalorder 1, %s12
      %p131 = scmp.lt.s32.totalorder %s12, 3
      %p132 = pnand %p130, %p131
      %p133 = pneg %p132
      // Predicated region
      $region9: #{causal_conv1d.1} parent=5 // pred_check
        _
      $region10: #{causal_conv1d.1} parent=5 // pred_check_branch
        %135 = sbr.rel (%p132) target = $region12
      $region11: #{causal_conv1d.1} parent=5 // pred_region
        %s136 = ssub.s32 %s12, 1
        // Predicated region
        $region13: #{causal_conv1d.1} parent=11 // pred_check
          %p137 = pneg %p73
        $region14: #{causal_conv1d.1} parent=11 // pred_check_branch
          %139 = sbr.rel (%p137) target = $region16
        $region15: #{causal_conv1d.1} parent=11 // pred_region
          _
        $region16: #{causal_conv1d.1} parent=11 // pred_fallthru
          _
        // Predicated region
        $region17: #{causal_conv1d.1} parent=11 // pred_check
          %p140 = pneg %p94
        $region18: #{causal_conv1d.1} parent=11 // pred_check_branch
          %142 = sbr.rel (%p140) target = $region20
        $region19: #{causal_conv1d.1} parent=11 // pred_region
          _
        $region20: #{causal_conv1d.1} parent=11 // pred_fallthru
          _
      $region12: #{causal_conv1d.1} parent=5 // pred_fallthru
        _
      %p143 = scmp.lt.s32.totalorder %s12, 2
      // Predicated region
      $region21: #{causal_conv1d.1} parent=5 // pred_check
        %p144 = pneg %p143
      $region22: #{causal_conv1d.1} parent=5 // pred_check_branch
        %146 = sbr.rel (%p144) target = $region24
      $region23: #{causal_conv1d.1} parent=5 // pred_region
        // Predicated region
        $region25: #{causal_conv1d.1} parent=23 // pred_check
          %p147 = pneg %p46
        $region26: #{causal_conv1d.1} parent=23 // pred_check_branch
          %149 = sbr.rel (%p147) target = $region28
        $region27: #{causal_conv1d.1} parent=23 // pred_region
          %p150 = scmp.lt.s32.totalorder %s19, 1
          %s151 = scalar_select %p150, %s19, 1
          %p152 = scmp.lt.s32.totalorder %s20, 0
          %s153 = scalar_select %p152, %s20, 0
          %s154 = sadd.s32 %s153, %s151
          %s155 = smul.addr %s154, 4
          %s156 = scalar_lea.vmem %s0, %s155
        $region28: #{causal_conv1d.1} parent=23 // pred_fallthru
          _
      $region24: #{causal_conv1d.1} parent=5 // pred_fallthru
        _
      %p157 = scmp.le.s32.totalorder 1, %s12
      %p158 = scmp.lt.s32.totalorder %s12, 3
      %p159 = pnand %p157, %p158
      %p160 = pneg %p159
      // Predicated region
      $region29: #{causal_conv1d.1} parent=5 // pred_check
        _
      $region30: #{causal_conv1d.1} parent=5 // pred_check_branch
        %162 = sbr.rel (%p159) target = $region32
      $region31: #{causal_conv1d.1} parent=5 // pred_region
        %s163 = ssub.s32 %s12, 1
        %p164 = scmp.lt.s32.totalorder %s21, 1
        %s165 = scalar_select %p164, %s21, 1
        %p166 = scmp.lt.s32.totalorder %s22, 0
        %s167 = scalar_select %p166, %s22, 0
        %s168 = sadd.s32 %s167, %s165
        %s169 = smul.addr %s168, 4
        %s170 = scalar_lea.vmem %s0, %s169
        %p171 = pneg %p52
        %p172 = pneg %p49
        %p173 = pneg %p73
        %p174 = pneg %p70
        %p175 = pneg %p94
        %p176 = pneg %p91
        %p177 = pneg %p122
        %p178 = pneg %p119
        %s179 = sand.u32 %s109, 1
        %s180 = scalar_lea.sflag [#allocation4], %s179
        %s181 = sand.u32 %s109, 1
        %s182 = smul.addr %s181, 8
        %s183 = scalar_lea.vmem [#allocation3], %s182
        %p184 = scmp.lt.s32.totalorder %s21, 1
        %s185 = scalar_select %p184, %s21, 1
        %p186 = scmp.lt.s32.totalorder %s22, 0
        %s187 = scalar_select %p186, %s22, 0
        %s188 = sadd.s32 %s187, %s185
        %s189 = smul.addr %s188, 4
        %s190 = scalar_lea.vmem %s0, %s189
        %v191 = vld [vmem:[%s190] sm:$0xf]
        %p192 = scmp.eq.s32.totalorder %s22, 0
        // Predicated region
        $region33: #{causal_conv1d.1} parent=31 // pred_check
          %p193 = pneg %p192
        $region34: #{causal_conv1d.1} parent=31 // pred_check_branch
          %195 = sbr.rel (%p193) target = $region36
        $region35: #{causal_conv1d.1} parent=31 // pred_region
          %vm196 = vcmask 11264
          %197 = vst.msk [vmem:[#allocation2] sm:$0xf] %vm196, 0.0
        $region36: #{causal_conv1d.1} parent=31 // pred_fallthru
          _
        %v198 = vld [vmem:[#allocation2] sm:$0xf]
        %200 = vrot.lane.b32.xlu0 %v191, 2
        %v201 = vpop.permute.xlu0 %200
        %vm203 = vcmask 15360
        %v204 = vsel %vm203, %v198, %v201
        %206 = vrot.lane.b32.xlu0 %v204, 112
        %v207 = vpop.permute.xlu0 %206
        %vm209 = vcmask 11264
        %210 = vst.msk [vmem:[#allocation2] sm:$0xf] %vm209, %v207
        %v211 = vld [vmem:[%s2] sm:$0xff]
        %213 = vset.pattern.permute.xlu0 0
        %214 = vperm.xlu0 %213, %v211
        %v215 = vpop.permute.xlu0 %214
        %v217 = vld [vmem:[%s1] sm:$0xff]
        %219 = vset.pattern.permute.xlu0 0
        %220 = vperm.xlu0 %219, %v217
        %v221 = vpop.permute.xlu0 %220
        %v223 = vlaneseq
        %v224 = vshrl.u32 %v223, 7
        %v225 = vsub.s32 0, %v224
        %v226 = vrot.slane %v204, %v225
        %v227 = vmul.f32 %v221, %v226
        %v228 = vadd.f32 %v215, %v227
        %229 = vset.pattern.permute.xlu0 1
        %230 = vperm.xlu0 %229, %v217
        %v231 = vpop.permute.xlu0 %230
        %v233 = vlaneseq
        %v234 = vshrl.u32 %v233, 7
        %v235 = vsub.s32 1, %v234
        %v236 = vrot.slane %v204, %v235
        %v237 = vmul.f32 %v231, %v236
        %v238 = vadd.f32 %v228, %v237
        %239 = vset.pattern.permute.xlu0 2
        %240 = vperm.xlu0 %239, %v217
        %v241 = vpop.permute.xlu0 %240
        %v243 = vlaneseq
        %v244 = vshrl.u32 %v243, 7
        %v245 = vsub.s32 2, %v244
        %v246 = vrot.slane %v204, %v245
        %v247 = vmul.f32 %v241, %v246
        %v248 = vadd.f32 %v238, %v247
        %249 = vset.pattern.permute.xlu0 3
        %250 = vperm.xlu0 %249, %v217
        %v251 = vpop.permute.xlu0 %250
        %v253 = vlaneseq
        %v254 = vshrl.u32 %v253, 7
        %v255 = vsub.s32 3, %v254
        %v256 = vrot.slane %v204, %v255
        %v257 = vmul.f32 %v251, %v256
        %v258 = vadd.f32 %v248, %v257
        %259 = vset.pattern.permute.xlu0 4
        %260 = vperm.xlu0 %259, %v217
        %v261 = vpop.permute.xlu0 %260
        %v263 = vmul.f32 %v261, %v226
        %265 = vrot.lane.b32.xlu0 %v263, 127
        %v266 = vpop.permute.xlu0 %265
        %v268 = vadd.f32 %v258, %v266
        %269 = vset.pattern.permute.xlu0 5
        %270 = vperm.xlu0 %269, %v217
        %v271 = vpop.permute.xlu0 %270
        %v273 = vmul.f32 %v271, %v236
        %275 = vrot.lane.b32.xlu0 %v273, 127
        %v276 = vpop.permute.xlu0 %275
        %v278 = vadd.f32 %v268, %v276
        %279 = vset.pattern.permute.xlu0 6
        %280 = vperm.xlu0 %279, %v217
        %v281 = vpop.permute.xlu0 %280
        %v283 = vmul.f32 %v281, %v246
        %285 = vrot.lane.b32.xlu0 %v283, 127
        %v286 = vpop.permute.xlu0 %285
        %v288 = vadd.f32 %v278, %v286
        %289 = vset.pattern.permute.xlu0 7
        %290 = vperm.xlu0 %289, %v217
        %v291 = vpop.permute.xlu0 %290
        %v293 = vmul.f32 %v291, %v256
        %295 = vrot.lane.b32.xlu0 %v293, 127
        %v296 = vpop.permute.xlu0 %295
        %v298 = vadd.f32 %v288, %v296
        %299 = vset.pattern.permute.xlu0 8
        %300 = vperm.xlu0 %299, %v217
        %v301 = vpop.permute.xlu0 %300
        %v303 = vmul.f32 %v301, %v226
        %305 = vrot.lane.b32.xlu0 %v303, 126
        %v306 = vpop.permute.xlu0 %305
        %v308 = vadd.f32 %v298, %v306
        %309 = vset.pattern.permute.xlu0 9
        %310 = vperm.xlu0 %309, %v217
        %v311 = vpop.permute.xlu0 %310
        %v313 = vmul.f32 %v311, %v236
        %315 = vrot.lane.b32.xlu0 %v313, 126
        %v316 = vpop.permute.xlu0 %315
        %v318 = vadd.f32 %v308, %v316
        %319 = vset.pattern.permute.xlu0 10
        %320 = vperm.xlu0 %319, %v217
        %v321 = vpop.permute.xlu0 %320
        %v323 = vmul.f32 %v321, %v246
        %325 = vrot.lane.b32.xlu0 %v323, 126
        %v326 = vpop.permute.xlu0 %325
        %v328 = vadd.f32 %v318, %v326
        %329 = vset.pattern.permute.xlu0 11
        %330 = vperm.xlu0 %329, %v217
        %v331 = vpop.permute.xlu0 %330
        %v333 = vmul.f32 %v331, %v256
        %335 = vrot.lane.b32.xlu0 %v333, 126
        %v336 = vpop.permute.xlu0 %335
        %v338 = vadd.f32 %v328, %v336
        %vm339 = vcmask 130048
        %340 = vst.msk [vmem:[%s183] sm:$0xff] %vm339, %v338
        %s341 = sand.u32 %s109, 1
        %s342 = scalar_lea.sflag [#allocation4], %s341
        %s343 = sand.u32 %s109, 1
        %s344 = smul.addr %s343, 8
        %s345 = scalar_lea.vmem [#allocation3], %s344
        // Predicated region
        $region37: #{causal_conv1d.1} parent=31 // pred_check
          %p346 = pneg %p119
        $region38: #{causal_conv1d.1} parent=31 // pred_check_branch
          %348 = sbr.rel (%p346) target = $region40
        $region39: #{causal_conv1d.1} parent=31 // pred_region
          %s350 = ssub.s32 128, 128
          %351 = vsyncadd %s342, %s350
          %s352 = sadd.s32 %s22, %s21
          %s353 = smul.addr %s352, 128
          %s354 = scalar_lea.hbm %s3, %s353
          %s356 = sshll.u32 %s345, 4
          %s357 = int_to_ptr.vmem [resolvable:$true] %s356
          %359 = dma.vmem_to_hbm [thread:$0]  %s357, 128, %s354, %s342
        $region40: #{causal_conv1d.1} parent=31 // pred_fallthru
          _
      $region32: #{causal_conv1d.1} parent=5 // pred_fallthru
        _
      %p360 = scmp.le.s32.totalorder 2, %s12
      // Predicated region
      $region41: #{causal_conv1d.1} parent=5 // pred_check
        %p361 = pneg %p360
      $region42: #{causal_conv1d.1} parent=5 // pred_check_branch
        %363 = sbr.rel (%p361) target = $region44
      $region43: #{causal_conv1d.1} parent=5 // pred_region
        %s364 = ssub.s32 %s12, 2
        // Predicated region
        $region45: #{causal_conv1d.1} parent=43 // pred_check
          %p365 = pneg %p125
        $region46: #{causal_conv1d.1} parent=43 // pred_check_branch
          %367 = sbr.rel (%p365) target = $region48
        $region47: #{causal_conv1d.1} parent=43 // pred_region
          %s368 = sand.u32 %s110, 1
          %s369 = scalar_lea.sflag [#allocation4], %s368
          %s370 = sand.u32 %s110, 1
          %s371 = smul.addr %s370, 8
          %s372 = scalar_lea.vmem [#allocation3], %s371
          %373 = dma.done %s369, 128
        $region48: #{causal_conv1d.1} parent=43 // pred_fallthru
          _
      $region44: #{causal_conv1d.1} parent=5 // pred_fallthru
        _
    $region6: #{causal_conv1d.1} parent=1 // loop_footer
      %s16 = sadd.s32 1, %s12
    $region7: #{causal_conv1d.1} parent=1 // loop_footer_branch
      %11 = sbr.rel target = $region3
    $region8: #{causal_conv1d.1} parent=1 // loop_exit
      _
    %374 = vsyncpa [#allocation4], 1
    %s375 = scalar_lea.sflag [#allocation4], 1
    %376 = vsyncpa %s375, 1

</llo_original>
